<compile_context>
chip_gen: v6e
topology: v6e:2x2x1
jax: 0.10.0
libtpu: 0.0.40
codegen_flags: <defaults>
</compile_context>

<pallas_src>
import functools
import math

import jax
import jax.numpy as jnp
from jax.experimental import pallas as pl
from jax.experimental.pallas import tpu as pltpu

_NEG_LOG_1E4 = -math.log(1e-4)   # -log(clamp(one_hot=0, min=1e-4)) = 9.2103...
_PROB_EPS = 1e-7


def _round_up(x, m):
    return ((x + m - 1) // m) * m


def _cdiv(a, b):
    return (a + b - 1) // b


def _vmem_capacity_bytes():
    try:
        return int(pltpu.get_tpu_info().vmem_capacity_bytes)
    except Exception:
        return 64 * 1024 * 1024   # conservative fallback: v7x per-TC VMEM


def _sce_kernel(pred_ref, labels_ref, out_ref, *, n_total, tile_n):
    """One (tile_n, C) block of logits -> (8, 128) tile with two partial sums.

    out[0, 0] = sum over valid rows of CE_row
    out[0, 1] = sum over valid rows of RCE_row
    (all other lanes zero)
    """
    i = pl.program_id(0)

    pred = pred_ref[...].astype(jnp.float32)                   # (T, C)
    labels = labels_ref[...]                                   # (T, 1) int32

    # Validity mask for padded rows in the last (ragged) block — applied
    # BEFORE the block reduction so garbage/NaN padded rows cannot leak in.
    row_ids = i * tile_n + jax.lax.broadcasted_iota(jnp.int32, (tile_n, 1), 0)
    valid = row_ids < n_total                                   # (T, 1)

    # Label-position mask (no float one-hot tensor is ever materialized).
    class_ids = jax.lax.broadcasted_iota(jnp.int32, pred.shape, 1)
    label_mask = class_ids == labels                            # (T, C)

    # Numerically-stable softmax pieces; exp is the only (T, C) transcendental.
    m = jnp.max(pred, axis=1, keepdims=True)                    # (T, 1)
    shifted = pred - m                                          # (T, C)
    exps = jnp.exp(shifted)                                     # (T, C)
    sum_exp = jnp.sum(exps, axis=1, keepdims=True)              # (T, 1)
    inv_sum = pl.reciprocal(sum_exp, approx=False)              # (T, 1)

    # Cross entropy per row: log(sum_exp) - (logit_at_label - max).
    shifted_at_label = jnp.sum(
        jnp.where(label_mask, shifted, 0.0), axis=1, keepdims=True)
    ce_row = jnp.log(sum_exp) - shifted_at_label                # (T, 1)

    # Reverse cross entropy per row:
    #   -sum_j clip(p_j,1e-7,1) * log(clip(onehot_j,1e-4,1))
    #     = -log(1e-4) * sum_{j != label} clip(p_j, 1e-7, 1)
    #     = -log(1e-4) * (inv_sum * sum_j max(exps_j, eps*sum_exp)
    #                      - max(p_label, eps))
    clip_sum = jnp.sum(
        jnp.maximum(exps, _PROB_EPS * sum_exp), axis=1, keepdims=True)
    p_label = jnp.exp(shifted_at_label) * inv_sum               # (T, 1)
    rce_row = _NEG_LOG_1E4 * (
        clip_sum * inv_sum - jnp.maximum(p_label, _PROB_EPS))   # (T, 1)

    # In-block reduction (mask first), then a single lane-dense (8,128) store.
    ce_sum = jnp.sum(jnp.where(valid, ce_row, 0.0))
    rce_sum = jnp.sum(jnp.where(valid, rce_row, 0.0))

    row_iota = jax.lax.broadcasted_iota(jnp.int32, (8, 128), 0)
    lane_iota = jax.lax.broadcasted_iota(jnp.int32, (8, 128), 1)
    ce_slot = ((row_iota == 0) & (lane_iota == 0)).astype(jnp.float32)
    rce_slot = ((row_iota == 0) & (lane_iota == 1)).astype(jnp.float32)
    out_ref[...] = ce_sum * ce_slot + rce_sum * rce_slot


def _choose_tile_n(n, c):
    """Pick tile_n: multiple of 8, double-buffered footprint within budget."""
    budget = min(_vmem_capacity_bytes() // 3, 40 * 1024 * 1024)
    # Double-buffered per-row bytes:
    #   pred block: c * 4 bytes/row
    #   label column (tile_n, 1): lane-padded to 128 lanes in VMEM -> 128*4 B/row
    bytes_per_row = 2 * (c * 4 + 128 * 4)
    tile = budget // bytes_per_row
    tile = min(tile, 8192)                 # amortizes ~0.35 us/step to <10%
    tile = min(tile, _round_up(n, 8))
    return max(8, (tile // 8) * 8)


def sce_loss(pred, labels, alpha=0.1, beta=1.0, num_classes=200, tile_n=None):
    """Symmetric Cross Entropy loss. pred: (N, C) float32, labels: (N,) int."""
    n, c = pred.shape
    assert c == num_classes
    labels_2d = labels.astype(jnp.int32).reshape(n, 1)

    if tile_n is None:
        tile_n = _choose_tile_n(n, c)
        num_blocks = _cdiv(n, tile_n)
        # Keep the parallel grid axis even (>=2) so it shards evenly across
        # v7x's two TensorCores; harmless on single-TC v5e/v6e.
        if n >= 16 and num_blocks % 2 == 1:
            num_blocks += 1
            tile_n = max(8, _round_up(_cdiv(n, num_blocks), 8))
    num_blocks = _cdiv(n, tile_n)

    # Explicit VMEM limit: double-buffered pred + lane-padded label column +
    # output tiles, plus headroom.  Raises v5e's 16 MiB scoped default when
    # needed; stays well inside v7x's 64 MiB physical VMEM.
    block_bytes = 2 * tile_n * (c * 4 + 128 * 4) + 2 * 8 * 128 * 4
    cap = _vmem_capacity_bytes()
    vmem_limit = min(max(block_bytes + (4 << 20), 16 << 20),
                     max(cap - (8 << 20), 16 << 20))

    kernel = functools.partial(_sce_kernel, n_total=n, tile_n=tile_n)
    partials = pl.pallas_call(
        kernel,
        grid=(num_blocks,),
        out_shape=jax.ShapeDtypeStruct((num_blocks * 8, 128), jnp.float32),
        in_specs=[
            pl.BlockSpec((tile_n, c), lambda i: (i, 0)),
            pl.BlockSpec((tile_n, 1), lambda i: (i, 0)),
        ],
        out_specs=pl.BlockSpec((8, 128), lambda i: (i, 0)),
        compiler_params=pltpu.CompilerParams(
            dimension_semantics=("parallel",),
            vmem_limit_bytes=int(vmem_limit)),
    )(pred, labels_2d)

    # Tiny final reduction over per-block partials.
    partials = partials.reshape(num_blocks, 8, 128)
    inv_n = 1.0 / n
    ce = jnp.sum(partials[:, 0, 0]) * inv_n
    rce = jnp.sum(partials[:, 0, 1]) * inv_n
    return alpha * ce + beta * rce


def _reference(pred, labels, alpha, beta, num_classes):
    # Pure-JAX reference mirroring the PyTorch module.
    log_probs = jax.nn.log_softmax(pred, axis=1)
    ce = -jnp.mean(jnp.take_along_axis(log_probs, labels[:, None], axis=1))
    probs = jnp.clip(jax.nn.softmax(pred, axis=1), 1e-7, 1.0)
    one_hot = jnp.clip(jax.nn.one_hot(labels, num_classes), 1e-4, 1.0)
    rce = -jnp.sum(probs * jnp.log(one_hot), axis=1)
    return alpha * ce + beta * jnp.mean(rce)


if __name__ == "__main__":
    key = jax.random.PRNGKey(0)
    k1, k2, k3, k4 = jax.random.split(key, 4)

    ALPHA, BETA = 0.1, 1.0
    NUM_CLASSES = 200

    # Case 1: small batch, single block.
    n1 = 8
    pred1 = jax.random.normal(k1, (n1, NUM_CLASSES), dtype=jnp.float32)
    lab1 = jax.random.randint(k2, (n1,), 0, NUM_CLASSES, dtype=jnp.int32)
    loss1 = jax.block_until_ready(
        sce_loss(pred1, lab1, ALPHA, BETA, NUM_CLASSES))
    ref1 = _reference(pred1, lab1, ALPHA, BETA, NUM_CLASSES)
    assert jnp.allclose(loss1, ref1, rtol=1e-5, atol=1e-5), (loss1, ref1)

    # Case 2: multi-block grid with a ragged last block (forced small tile;
    # exercises the pipelined path, padded-row masking and in-block reduce).
    n2 = 50
    pred2 = jax.random.normal(k3, (n2, NUM_CLASSES), dtype=jnp.float32)
    lab2 = jax.random.randint(k4, (n2,), 0, NUM_CLASSES, dtype=jnp.int32)
    loss2 = jax.block_until_ready(
        sce_loss(pred2, lab2, ALPHA, BETA, NUM_CLASSES, tile_n=16))
    ref2 = _reference(pred2, lab2, ALPHA, BETA, NUM_CLASSES)
    assert jnp.allclose(loss2, ref2, rtol=1e-5, atol=1e-5), (loss2, ref2)

    # Case 3: auto tile selection (exercises the even-block split path:
    # num_blocks=2, ragged second block).
    loss3 = jax.block_until_ready(
        sce_loss(pred2, lab2, ALPHA, BETA, NUM_CLASSES))
    assert jnp.allclose(loss3, ref2, rtol=1e-5, atol=1e-5), (loss3, ref2)

    print("KERNEL_OK")
</pallas_src>

<mosaic_0001>
module attributes {stable_mosaic.version = 11 : i64} {
  func.func @_sce_kernel(%arg0: i32, %arg1: memref<8x200xf32, #tpu.memory_space<vmem>>, %arg2: memref<8x1xi32, #tpu.memory_space<vmem>>, %arg3: memref<8x128xf32, #tpu.memory_space<vmem>>) attributes {dimension_semantics = [#tpu.dimension_semantics<parallel>], iteration_bounds = array<i64: 1>, scalar_prefetch = 0 : i64, scratch_operands = 0 : i64, tpu.core_type = #tpu.core_type<tc>, window_params = [{transform_indices = @transform_0, window_bounds = array<i64: 8, 200>}, {transform_indices = @transform_1, window_bounds = array<i64: 8, 1>}, {transform_indices = @transform_2, window_bounds = array<i64: 8, 128>}]} {
    %c0 = arith.constant 0 : index
    %c0_0 = arith.constant 0 : index
    %0 = vector.load %arg1[%c0, %c0_0] : memref<8x200xf32, #tpu.memory_space<vmem>>, vector<8x200xf32>
    %c0_1 = arith.constant 0 : index
    %c0_2 = arith.constant 0 : index
    %1 = vector.load %arg2[%c0_1, %c0_2] : memref<8x1xi32, #tpu.memory_space<vmem>>, vector<8x1xi32>
    %c8_i32 = arith.constant 8 : i32
    %2 = arith.muli %arg0, %c8_i32 : i32
    %3 = tpu.iota {dimensions = array<i32: 0>} : vector<8x1xi32>
    %4 = vector.broadcast %2 : i32 to vector<8x1xi32>
    %5 = arith.addi %4, %3 : vector<8x1xi32>
    %c8_i32_3 = arith.constant 8 : i32
    %6 = vector.broadcast %c8_i32_3 : i32 to vector<8x1xi32>
    %7 = arith.cmpi slt, %5, %6 : vector<8x1xi32>
    %8 = tpu.iota {dimensions = array<i32: 1>} : vector<8x200xi32>
    %9 = vector.broadcast %1 : vector<8x1xi32> to vector<8x200xi32>
    %10 = arith.cmpi eq, %8, %9 : vector<8x200xi32>
    %cst = arith.constant dense<0xFF800000> : vector<8xf32>
    %11 = vector.multi_reduction <maximumf>, %0, %cst [1] : vector<8x200xf32> to vector<8xf32>
    %12 = vector.shape_cast %11 : vector<8xf32> to vector<8x1xf32>
    %13 = vector.broadcast %12 : vector<8x1xf32> to vector<8x200xf32>
    %14 = arith.subf %0, %13 : vector<8x200xf32>
    %15 = math.exp %14 : vector<8x200xf32>
    %cst_4 = arith.constant dense<0.000000e+00> : vector<8xf32>
    %16 = vector.multi_reduction <add>, %15, %cst_4 [1] : vector<8x200xf32> to vector<8xf32>
    %17 = vector.shape_cast %16 : vector<8xf32> to vector<8x1xf32>
    %18 = tpu.reciprocal %17 : vector<8x1xf32> -> vector<8x1xf32>
    %cst_5 = arith.constant 0.000000e+00 : f32
    %19 = vector.broadcast %cst_5 : f32 to vector<8x200xf32>
    %20 = arith.select %10, %14, %19 : vector<8x200xi1>, vector<8x200xf32>
    %cst_6 = arith.constant dense<0.000000e+00> : vector<8xf32>
    %21 = vector.multi_reduction <add>, %20, %cst_6 [1] : vector<8x200xf32> to vector<8xf32>
    %22 = vector.shape_cast %21 : vector<8xf32> to vector<8x1xf32>
    %23 = math.log %17 : vector<8x1xf32>
    %24 = arith.subf %23, %22 : vector<8x1xf32>
    %cst_7 = arith.constant 1.000000e-07 : f32
    %25 = vector.broadcast %cst_7 : f32 to vector<8x1xf32>
    %26 = arith.mulf %25, %17 : vector<8x1xf32>
    %27 = vector.broadcast %26 : vector<8x1xf32> to vector<8x200xf32>
    %28 = arith.maximumf %15, %27 : vector<8x200xf32>
    %cst_8 = arith.constant dense<0.000000e+00> : vector<8xf32>
    %29 = vector.multi_reduction <add>, %28, %cst_8 [1] : vector<8x200xf32> to vector<8xf32>
    %30 = vector.shape_cast %29 : vector<8xf32> to vector<8x1xf32>
    %31 = math.exp %22 : vector<8x1xf32>
    %32 = arith.mulf %31, %18 : vector<8x1xf32>
    %33 = arith.mulf %30, %18 : vector<8x1xf32>
    %cst_9 = arith.constant 1.000000e-07 : f32
    %34 = vector.broadcast %cst_9 : f32 to vector<8x1xf32>
    %35 = arith.maximumf %32, %34 : vector<8x1xf32>
    %36 = arith.subf %33, %35 : vector<8x1xf32>
    %cst_10 = arith.constant 9.21034049 : f32
    %37 = vector.broadcast %cst_10 : f32 to vector<8x1xf32>
    %38 = arith.mulf %37, %36 : vector<8x1xf32>
    %cst_11 = arith.constant 0.000000e+00 : f32
    %39 = vector.broadcast %cst_11 : f32 to vector<8x1xf32>
    %40 = arith.select %7, %24, %39 : vector<8x1xi1>, vector<8x1xf32>
    %41 = vector.shape_cast %40 : vector<8x1xf32> to vector<1x8x1xf32>
    %cst_12 = arith.constant dense<0.000000e+00> : vector<1xf32>
    %42 = vector.multi_reduction <add>, %41, %cst_12 [1, 2] : vector<1x8x1xf32> to vector<1xf32>
    %43 = vector.shape_cast %42 : vector<1xf32> to vector<1x1x1xf32>
    %44 = vector.extract %43[0, 0, 0] : f32 from vector<1x1x1xf32>
    %cst_13 = arith.constant 0.000000e+00 : f32
    %45 = vector.broadcast %cst_13 : f32 to vector<8x1xf32>
    %46 = arith.select %7, %38, %45 : vector<8x1xi1>, vector<8x1xf32>
    %47 = vector.shape_cast %46 : vector<8x1xf32> to vector<1x8x1xf32>
    %cst_14 = arith.constant dense<0.000000e+00> : vector<1xf32>
    %48 = vector.multi_reduction <add>, %47, %cst_14 [1, 2] : vector<1x8x1xf32> to vector<1xf32>
    %49 = vector.shape_cast %48 : vector<1xf32> to vector<1x1x1xf32>
    %50 = vector.extract %49[0, 0, 0] : f32 from vector<1x1x1xf32>
    %51 = tpu.iota {dimensions = array<i32: 0>} : vector<8x128xi32>
    %52 = tpu.iota {dimensions = array<i32: 1>} : vector<8x128xi32>
    %c0_i32 = arith.constant 0 : i32
    %53 = vector.broadcast %c0_i32 : i32 to vector<8x128xi32>
    %54 = arith.cmpi eq, %51, %53 : vector<8x128xi32>
    %c0_i32_15 = arith.constant 0 : i32
    %55 = vector.broadcast %c0_i32_15 : i32 to vector<8x128xi32>
    %56 = arith.cmpi eq, %52, %55 : vector<8x128xi32>
    %57 = arith.andi %54, %56 : vector<8x128xi1>
    %58 = arith.extui %57 : vector<8x128xi1> to vector<8x128xi32>
    %59 = arith.sitofp %58 : vector<8x128xi32> to vector<8x128xf32>
    %c0_i32_16 = arith.constant 0 : i32
    %60 = vector.broadcast %c0_i32_16 : i32 to vector<8x128xi32>
    %61 = arith.cmpi eq, %51, %60 : vector<8x128xi32>
    %c1_i32 = arith.constant 1 : i32
    %62 = vector.broadcast %c1_i32 : i32 to vector<8x128xi32>
    %63 = arith.cmpi eq, %52, %62 : vector<8x128xi32>
    %64 = arith.andi %61, %63 : vector<8x128xi1>
    %65 = arith.extui %64 : vector<8x128xi1> to vector<8x128xi32>
    %66 = arith.sitofp %65 : vector<8x128xi32> to vector<8x128xf32>
    %67 = vector.broadcast %44 : f32 to vector<8x128xf32>
    %68 = arith.mulf %67, %59 : vector<8x128xf32>
    %69 = vector.broadcast %50 : f32 to vector<8x128xf32>
    %70 = arith.mulf %69, %66 : vector<8x128xf32>
    %71 = arith.addf %68, %70 : vector<8x128xf32>
    %c0_17 = arith.constant 0 : index
    %c0_18 = arith.constant 0 : index
    %72 = vector.load %arg3[%c0_17, %c0_18] : memref<8x128xf32, #tpu.memory_space<vmem>>, vector<8x128xf32>
    tpu.vector_store %arg3[%c0_17, %c0_18], %71 {strides = array<i32>} : memref<8x128xf32, #tpu.memory_space<vmem>>, vector<8x128xf32>,
    return
  }
  func.func @transform_0(%arg0: i32) -> (i32, i32) {
    %c0_i32 = arith.constant 0 : i32
    %c0_i32_0 = arith.constant 0 : i32
    return %arg0, %c0_i32 : i32, i32
  }
  func.func @transform_1(%arg0: i32) -> (i32, i32) {
    %c0_i32 = arith.constant 0 : i32
    %c0_i32_0 = arith.constant 0 : i32
    return %arg0, %c0_i32 : i32, i32
  }
  func.func @transform_2(%arg0: i32) -> (i32, i32) {
    %c0_i32 = arith.constant 0 : i32
    %c0_i32_0 = arith.constant 0 : i32
    return %arg0, %c0_i32 : i32, i32
  }
}

</mosaic_0001>

<llo_original>
// kernel: tpu_custom_call.1
$region0: #{tpu_custom_call.1}
  #allocation0 [shape = 'u32[]', space=smem, size = 0x4, offset = 0x4, fixed_abs, tag = 'smem constant byte address 0x4 - core index']
  #allocation1 [shape = 'u32[144,128]{1,0:T(1,128)}', space=vmem, size = 0x12000, scoped, tag = 'internal scratch']
  %s0 = inlined_call_operand.hbm [shape: f32[8,200], index: 0, kind: input, shape index: {}]
  %s1 = inlined_call_operand.vmem [shape: s32[8,1], index: 1, kind: input, shape index: {}]
  %s2 = inlined_call_operand.hbm [shape: f32[8,128], index: 2, kind: output, shape index: {}]
  %s3 = sld [smem:[#allocation0]]
  $region22: #{tpu_custom_call.1} parent=0
    _
  %s5 = ssub.s32 1, %s3
  %s6 = scalar_select 0, %s5, %s3
  $region1: #{tpu_custom_call.1} parent=0
    #allocation2 [shape = 'u8[8192]{0}', space=vmem, size = 0x2000, scoped, tag = 'input window, operand 0, single buffered']
    #allocation3 [shape = 's32[1]{0}', space=sflag, size = 0x4, scoped, tag = 'scoped memory for tpu_custom_call.1']
    #allocation4 [shape = 's32[1]{0}', space=sflag, size = 0x4, scoped, tag = 'scoped memory for tpu_custom_call.1']
    #allocation5 [shape = 'u8[4096]{0}', space=vmem, size = 0x1000, scoped, tag = 'output window, operand 0, single buffered']
    %7 = vsyncpa [#allocation3], 0
    %8 = vsyncpa [#allocation4], 0
    // Predicated region
    $region2: #{tpu_custom_call.1} parent=1 // pred_check
      _
    $region3: #{tpu_custom_call.1} parent=1 // pred_check_branch
      %10 = sbr.rel (0) target = $region5
    $region4: #{tpu_custom_call.1} parent=1 // pred_region
      %s12 = ssub.s32 256, 256
      %13 = vsyncadd [#allocation3], %s12
      %s15 = sshll.u32 [#allocation2], 4
      %s16 = int_to_ptr.vmem [resolvable:$true] %s15
      %18 = dma.hbm_to_vmem [thread:$0]  %s0, 256, %s16, [#allocation3]
    $region5: #{tpu_custom_call.1} parent=1 // pred_fallthru
      _
    // Predicated region
    $region6: #{tpu_custom_call.1} parent=1 // pred_check
      _
    $region7: #{tpu_custom_call.1} parent=1 // pred_check_branch
      %20 = sbr.rel (0) target = $region9
    $region8: #{tpu_custom_call.1} parent=1 // pred_region
      _
    $region9: #{tpu_custom_call.1} parent=1 // pred_fallthru
      _
    // Predicated region
    $region10: #{tpu_custom_call.1} parent=1 // pred_check
      _
    $region11: #{tpu_custom_call.1} parent=1 // pred_check_branch
      %22 = sbr.rel (0) target = $region13
    $region12: #{tpu_custom_call.1} parent=1 // pred_region
      %23 = dma.done [#allocation3], 256
    $region13: #{tpu_custom_call.1} parent=1 // pred_fallthru
      _
    %v24 = vld [vmem:[#allocation2] sm:$0xff]
    %v25 = vld [vmem:[#allocation2 + $0x8] sm:$0xff]
    %v26 = vld [vmem:[%s1] sm:$0xff]
    %s27 = smul.u32 0, 8
    %v28 = vlaneseq
    %v29 = vshrl.u32 %v28, 7
    %v30 = vstv %s27
    %v31 = vadd.s32 %v30, %v29
    %vm32 = vcmp.lt.s32.totalorder %v31, 8
    %v33 = vlaneseq
    %v34 = vand.u32 %v33, 127
    %v35 = vadd.s32 %v34, 128
    %36 = vset.pattern.permute.xlu0 0
    %37 = vperm.xlu0 %36, %v26
    %v38 = vpop.permute.xlu0 %37
    %vm39 = vcmp.eq.s32.totalorder %v34, %v38
    %vm40 = vcmp.eq.s32.totalorder %v35, %v38
    %vm41 = vcmask 588800
    %v42 = vsel %vm41, %v25, -inf
    %v43 = vmax.f32 %v24, %v42
    %44 = vmax.xlane.f32.xlu0 %v43
    %v45 = vpop.xlane.xlu0 %44
    %v46 = vsub.f32 %v24, %v45
    %v47 = vsub.f32 %v25, %v45
    %v48 = vmul.f32 %v46, 1.442695
    %v49 = vpow.pop %v48
    %v50 = vmul.f32 %v47, 1.442695
    %v51 = vpow.pop %v50
    %v52 = vsel %vm41, %v51, 0.0
    %v53 = vadd.f32 %v49, %v52
    %54 = vadd.xlane.f32.xlu0 %v53
    %v55 = vpop.xlane.xlu0 %54
    %v56 = vrcp.pop %v55
    %v57 = vsel %vm39, %v46, 0.0
    %v58 = vsel %vm40, %v47, 0.0
    %v59 = vsel %vm41, %v58, 0.0
    %v60 = vadd.f32 %v57, %v59
    %61 = vadd.xlane.f32.xlu0 %v60
    %v62 = vpop.xlane.xlu0 %61
    %v63 = vlog2.pop %v55
    %v64 = vmul.f32 %v63, 0.6931472
    %v65 = vsub.f32 %v64, %v62
    %v66 = vmul.f32 %v55, 1e-07
    %v67 = vmax.f32 %v49, %v66
    %v68 = vmax.f32 %v51, %v66
    %v69 = vsel %vm41, %v68, 0.0
    %v70 = vadd.f32 %v67, %v69
    %71 = vadd.xlane.f32.xlu0 %v70
    %v72 = vpop.xlane.xlu0 %71
    %v73 = vmul.f32 %v62, 1.442695
    %v74 = vpow.pop %v73
    %v75 = vmul.f32 %v74, %v56
    %v76 = vmul.f32 %v72, %v56
    %v77 = vmax.f32 %v75, 1e-07
    %v78 = vsub.f32 %v76, %v77
    %v79 = vmul.f32 %v78, 9.2103405
    %v80 = vsel %vm32, %v65, 0.0
    %vm81 = vcmask 7168
    %v82 = vsel %vm81, %v80, 0.0
    %83 = vadd.xlane.f32.xlu0 %v82
    %v84 = vpop.xlane.xlu0 %83
    %v85 = vrot.slane %v84, 4
    %v86 = vadd.f32 %v84, %v85
    %v87 = vrot.slane %v86, 2
    %v88 = vadd.f32 %v86, %v87
    %v89 = vrot.slane %v88, 1
    %v90 = vadd.f32 %v88, %v89
    %s91 = vtos %v90
    %v92 = vsel %vm32, %v79, 0.0
    %v93 = vsel %vm81, %v92, 0.0
    %94 = vadd.xlane.f32.xlu0 %v93
    %v95 = vpop.xlane.xlu0 %94
    %v96 = vrot.slane %v95, 4
    %v97 = vadd.f32 %v95, %v96
    %v98 = vrot.slane %v97, 2
    %v99 = vadd.f32 %v97, %v98
    %v100 = vrot.slane %v99, 1
    %v101 = vadd.f32 %v99, %v100
    %s102 = vtos %v101
    %vm103 = vcmp.eq.s32.totalorder %v29, 0
    %vm104 = vcmp.eq.s32.totalorder %v34, 0
    %vm105 = vmand %vm103, %vm104
    %v106 = vsel %vm105, 1, 0
    %v107 = vcvt.s32.f32 %v106
    %vm108 = vcmp.eq.s32.totalorder %v34, 1
    %vm109 = vmand %vm103, %vm108
    %v110 = vsel %vm109, 1, 0
    %v111 = vcvt.s32.f32 %v110
    %v112 = vstv %s91
    %v113 = vmul.f32 %v112, %v107
    %v114 = vstv %s102
    %v115 = vmul.f32 %v114, %v111
    %v116 = vadd.f32 %v113, %v115
    %117 = vst [vmem:[#allocation5] sm:$0xff] %v116
    // Predicated region
    $region14: #{tpu_custom_call.1} parent=1 // pred_check
      _
    $region15: #{tpu_custom_call.1} parent=1 // pred_check_branch
      %119 = sbr.rel (0) target = $region17
    $region16: #{tpu_custom_call.1} parent=1 // pred_region
      %s121 = ssub.s32 128, 128
      %122 = vsyncadd [#allocation4], %s121
      %s124 = sshll.u32 [#allocation5], 4
      %s125 = int_to_ptr.vmem [resolvable:$true] %s124
      %127 = dma.vmem_to_hbm [thread:$0]  %s125, 128, %s2, [#allocation4]
    $region17: #{tpu_custom_call.1} parent=1 // pred_fallthru
      _
    // Predicated region
    $region18: #{tpu_custom_call.1} parent=1 // pred_check
      _
    $region19: #{tpu_custom_call.1} parent=1 // pred_check_branch
      %129 = sbr.rel (0) target = $region21
    $region20: #{tpu_custom_call.1} parent=1 // pred_region
      %130 = dma.done [#allocation4], 128
    $region21: #{tpu_custom_call.1} parent=1 // pred_fallthru
      _
    %131 = vsyncpa [#allocation3], 1
    %132 = vsyncpa [#allocation4], 1

</llo_original>
